<compile_context>
chip_gen: v5e
topology: v5e:2x2
jax: 0.10.0
libtpu: 0.0.40
codegen_flags: <defaults>
</compile_context>

<pallas_src>
import jax
import jax.numpy as jnp
from jax.experimental import pallas as pl
from jax.experimental.pallas import tpu as pltpu

IN_FEATURES = 176
OUT_FEATURES = 126
OUT_PAD = 128          # lane-dense output width
NEG_SLOPE = 0.02
MAX_TM = 512           # batch tile (multiple of 256 -> fills the v6e/v7x MXU M side)
PAD_BIAS = -1e30       # pad lanes -> LeakyReLU keeps them hugely negative -> exp == 0


def _network_kernel(x_ref, w_ref, b_ref, o_ref):
    # Linear: (TM, 176) @ (176, 128) + (1, 128)
    y = jnp.dot(x_ref[...], w_ref[...], preferred_element_type=jnp.float32)
    y = y + b_ref[...]                       # bias broadcast over batch rows

    # LeakyReLU(negative_slope=0.02)
    y = jnp.where(y >= 0.0, y, NEG_SLOPE * y)

    # Numerically stable softmax over the (padded) feature axis.
    # Pad lanes carry ~-2e28 after LeakyReLU, so exp underflows to 0 and they
    # contribute nothing to the denominator.
    m = jnp.max(y, axis=-1, keepdims=True)
    e = jnp.exp(y - m)
    denom = jnp.sum(e, axis=-1, keepdims=True)

    # EUP approximate reciprocal + one Newton step (error ~ eps^2 << 1e-5 rtol).
    inv = pl.reciprocal(denom, approx=True)
    inv = inv * (2.0 - denom * inv)

    o_ref[...] = e * inv


def network_forward(x, w, b):
    """x: (B, 176) f32, w: (176, 126) f32, b: (126,) f32 -> (B, 126) f32."""
    B = x.shape[0]

    # --- lane-dense padding of the output feature dim (126 -> 128) ---
    w_p = jnp.zeros((IN_FEATURES, OUT_PAD), jnp.float32).at[:, :OUT_FEATURES].set(w)
    b_p = jnp.full((1, OUT_PAD), PAD_BIAS, jnp.float32).at[0, :OUT_FEATURES].set(b)

    # --- batch tiling: pad B to a multiple of the tile so blocks satisfy (8,128) ---
    b8 = 8 * pl.cdiv(B, 8)                 # sublane-align
    tm = min(MAX_TM, b8)                   # tile size (multiple of 8)
    n_tiles = pl.cdiv(b8, tm)
    b_pad = n_tiles * tm
    if b_pad != B:
        x_p = jnp.zeros((b_pad, IN_FEATURES), jnp.float32).at[:B].set(x)
    else:
        x_p = x

    out = pl.pallas_call(
        _network_kernel,
        out_shape=jax.ShapeDtypeStruct((b_pad, OUT_PAD), jnp.float32),
        grid_spec=pltpu.PrefetchScalarGridSpec(
            num_scalar_prefetch=0,
            grid=(n_tiles,),
            in_specs=[
                # x tile marches with the grid (double-buffered by Pallas)
                pl.BlockSpec((tm, IN_FEATURES), lambda i: (i, 0)),
                # weight + bias stay resident in VMEM across all steps
                pl.BlockSpec((IN_FEATURES, OUT_PAD), lambda i: (0, 0)),
                pl.BlockSpec((1, OUT_PAD), lambda i: (0, 0)),
            ],
            out_specs=pl.BlockSpec((tm, OUT_PAD), lambda i: (i, 0)),
        ),
        compiler_params=pltpu.CompilerParams(
            # batch tiles are independent -> shard across v7x's 2 TensorCores
            dimension_semantics=("parallel",),
            # per-step footprint (TM=512): 2x352KB x-bufs + 2x256KB out-bufs
            # + 88KB resident W  ~= 1.3 MiB, well under v7x's 32 MiB scoped VMEM
            vmem_limit_bytes=32 * 1024 * 1024,
        ),
    )(x_p, w_p, b_p)

    # strip batch padding and the 2 pad lanes
    return out[:B, :OUT_FEATURES]


def reference_forward(x, w, b):
    y = x @ w + b
    y = jnp.where(y >= 0.0, y, NEG_SLOPE * y)
    return jax.nn.softmax(y, axis=-1)


if __name__ == "__main__":
    key = jax.random.PRNGKey(0)
    kx, kw, kb = jax.random.split(key, 3)

    # Deterministic init mimicking PyTorch Linear default: U(-1/sqrt(fan_in), ...)
    bound = 1.0 / (IN_FEATURES ** 0.5)
    w = jax.random.uniform(kw, (IN_FEATURES, OUT_FEATURES), dtype=jnp.float32,
                           minval=-bound, maxval=bound)
    b = jax.random.uniform(kb, (OUT_FEATURES,), dtype=jnp.float32,
                           minval=-bound, maxval=bound)

    ok = True
    for batch in (8, 37):   # 37 exercises the batch-padding path
        x = jax.random.normal(jax.random.fold_in(kx, batch),
                              (batch, IN_FEATURES), dtype=jnp.float32)

        out = network_forward(x, w, b)
        out = jax.block_until_ready(out)

        ref = reference_forward(x, w, b)
        assert out.shape == (batch, OUT_FEATURES)
        assert jnp.allclose(out, ref, atol=1e-5, rtol=1e-5), \
            f"mismatch vs reference (batch={batch})"
        assert jnp.allclose(jnp.sum(out, axis=-1), 1.0, atol=1e-5), \
            f"softmax rows must sum to 1 (batch={batch})"

    if ok:
        print("KERNEL_OK")
</pallas_src>

<mosaic_0001>
module attributes {stable_mosaic.version = 11 : i64} {
  func.func @_network_kernel(%arg0: i32, %arg1: memref<8x176xf32, #tpu.memory_space<vmem>>, %arg2: memref<176x128xf32, #tpu.memory_space<vmem>>, %arg3: memref<1x128xf32, #tpu.memory_space<vmem>>, %arg4: memref<8x128xf32, #tpu.memory_space<vmem>>) attributes {dimension_semantics = [#tpu.dimension_semantics<parallel>], iteration_bounds = array<i64: 1>, scalar_prefetch = 0 : i64, scratch_operands = 0 : i64, tpu.core_type = #tpu.core_type<tc>, window_params = [{transform_indices = @transform_0, window_bounds = array<i64: 8, 176>}, {pipeline_mode = #tpu.pipeline_mode<synchronous>, transform_indices = @transform_1, window_bounds = array<i64: 176, 128>}, {pipeline_mode = #tpu.pipeline_mode<synchronous>, transform_indices = @transform_2, window_bounds = array<i64: 1, 128>}, {transform_indices = @transform_3, window_bounds = array<i64: 8, 128>}]} {
    %c0 = arith.constant 0 : index
    %c0_0 = arith.constant 0 : index
    %0 = vector.load %arg1[%c0, %c0_0] : memref<8x176xf32, #tpu.memory_space<vmem>>, vector<8x176xf32>
    %c0_1 = arith.constant 0 : index
    %c0_2 = arith.constant 0 : index
    %1 = vector.load %arg2[%c0_1, %c0_2] : memref<176x128xf32, #tpu.memory_space<vmem>>, vector<176x128xf32>
    %cst = arith.constant dense<0.000000e+00> : vector<8x128xf32>
    %2 = tpu.matmul %0, %1, %cst {dimension_numbers = #tpu.dot_dimension_numbers<[1], [0], [0], [1], [0, 0, 1, 1], [], []>} : vector<8x176xf32>, vector<176x128xf32>, vector<8x128xf32> -> vector<8x128xf32>
    %c0_3 = arith.constant 0 : index
    %c0_4 = arith.constant 0 : index
    %3 = vector.load %arg3[%c0_3, %c0_4] : memref<1x128xf32, #tpu.memory_space<vmem>>, vector<1x128xf32>
    %4 = vector.broadcast %3 : vector<1x128xf32> to vector<8x128xf32>
    %5 = arith.addf %2, %4 : vector<8x128xf32>
    %cst_5 = arith.constant 0.000000e+00 : f32
    %6 = vector.broadcast %cst_5 : f32 to vector<8x128xf32>
    %7 = arith.cmpf oge, %5, %6 : vector<8x128xf32>
    %cst_6 = arith.constant 2.000000e-02 : f32
    %8 = vector.broadcast %cst_6 : f32 to vector<8x128xf32>
    %9 = arith.mulf %8, %5 : vector<8x128xf32>
    %10 = arith.select %7, %5, %9 : vector<8x128xi1>, vector<8x128xf32>
    %cst_7 = arith.constant dense<0xFF800000> : vector<8xf32>
    %11 = vector.multi_reduction <maximumf>, %10, %cst_7 [1] : vector<8x128xf32> to vector<8xf32>
    %12 = vector.shape_cast %11 : vector<8xf32> to vector<8x1xf32>
    %13 = vector.broadcast %12 : vector<8x1xf32> to vector<8x128xf32>
    %14 = arith.subf %10, %13 : vector<8x128xf32>
    %15 = math.exp %14 : vector<8x128xf32>
    %cst_8 = arith.constant dense<0.000000e+00> : vector<8xf32>
    %16 = vector.multi_reduction <add>, %15, %cst_8 [1] : vector<8x128xf32> to vector<8xf32>
    %17 = vector.shape_cast %16 : vector<8xf32> to vector<8x1xf32>
    %18 = tpu.reciprocal %17 {approx = true} : vector<8x1xf32> -> vector<8x1xf32>
    %19 = arith.mulf %17, %18 : vector<8x1xf32>
    %cst_9 = arith.constant 2.000000e+00 : f32
    %20 = vector.broadcast %cst_9 : f32 to vector<8x1xf32>
    %21 = arith.subf %20, %19 : vector<8x1xf32>
    %22 = arith.mulf %18, %21 : vector<8x1xf32>
    %23 = vector.broadcast %22 : vector<8x1xf32> to vector<8x128xf32>
    %24 = arith.mulf %15, %23 : vector<8x128xf32>
    %c0_10 = arith.constant 0 : index
    %c0_11 = arith.constant 0 : index
    %25 = vector.load %arg4[%c0_10, %c0_11] : memref<8x128xf32, #tpu.memory_space<vmem>>, vector<8x128xf32>
    tpu.vector_store %arg4[%c0_10, %c0_11], %24 {strides = array<i32>} : memref<8x128xf32, #tpu.memory_space<vmem>>, vector<8x128xf32>,
    return
  }
  func.func @transform_0(%arg0: i32) -> (i32, i32) {
    %c0_i32 = arith.constant 0 : i32
    %c0_i32_0 = arith.constant 0 : i32
    return %arg0, %c0_i32 : i32, i32
  }
  func.func @transform_1(%arg0: i32) -> (i32, i32) {
    %c0_i32 = arith.constant 0 : i32
    %c0_i32_0 = arith.constant 0 : i32
    %c0_i32_1 = arith.constant 0 : i32
    return %c0_i32, %c0_i32_0 : i32, i32
  }
  func.func @transform_2(%arg0: i32) -> (i32, i32) {
    %c0_i32 = arith.constant 0 : i32
    %c0_i32_0 = arith.constant 0 : i32
    %c0_i32_1 = arith.constant 0 : i32
    return %c0_i32, %c0_i32_0 : i32, i32
  }
  func.func @transform_3(%arg0: i32) -> (i32, i32) {
    %c0_i32 = arith.constant 0 : i32
    %c0_i32_0 = arith.constant 0 : i32
    return %arg0, %c0_i32 : i32, i32
  }
}

</mosaic_0001>

<llo_original>
// kernel: tpu_custom_call.1
$region0: #{tpu_custom_call.1}
  #allocation0 [shape = 'u32[]', space=smem, size = 0x4, offset = 0x4, fixed_abs, tag = 'smem constant byte address 0x4 - core index']
  #allocation1 [shape = 'u32[72,128]{1,0:T(1,128)}', space=vmem, size = 0x9000, scoped, tag = 'internal scratch']
  %s0 = inlined_call_operand.hbm [shape: f32[8,176], index: 0, kind: input, shape index: {}]
  %s1 = inlined_call_operand.hbm [shape: f32[176,128], index: 1, kind: input, shape index: {}]
  %s2 = inlined_call_operand.vmem [shape: f32[1,128], index: 2, kind: input, shape index: {}]
  %s3 = inlined_call_operand.hbm [shape: f32[8,128], index: 3, kind: output, shape index: {}]
  %s4 = sld [smem:[#allocation0]]
  $region30: #{tpu_custom_call.1} parent=0
    _
  %s6 = ssub.s32 1, %s4
  %s7 = scalar_select 0, %s6, %s4
  $region1: #{tpu_custom_call.1} parent=0
    #allocation2 [shape = 'u8[8192]{0}', space=vmem, size = 0x2000, scoped, tag = 'input window, operand 0, single buffered']
    #allocation3 [shape = 's32[1]{0}', space=sflag, size = 0x4, scoped, tag = 'scoped memory for tpu_custom_call.1']
    #allocation4 [shape = 's32[1]{0}', space=sflag, size = 0x4, scoped, tag = 'scoped memory for tpu_custom_call.1']
    #allocation5 [shape = 'u8[90112]{0}', space=vmem, size = 0x16000, scoped, tag = 'input window, operand 1, single buffered']
    #allocation6 [shape = 's32[1]{0}', space=sflag, size = 0x4, scoped, tag = 'scoped memory for tpu_custom_call.1']
    #allocation7 [shape = 'u8[4096]{0}', space=vmem, size = 0x1000, scoped, tag = 'output window, operand 0, single buffered']
    %8 = vsyncpa [#allocation3], 0
    %9 = vsyncpa [#allocation6], 0
    %10 = vsyncpa [#allocation4], 0
    // Predicated region
    $region2: #{tpu_custom_call.1} parent=1 // pred_check
      _
    $region3: #{tpu_custom_call.1} parent=1 // pred_check_branch
      %12 = sbr.rel (0) target = $region5
    $region4: #{tpu_custom_call.1} parent=1 // pred_region
      %14 = vsyncadd [#allocation3], 0
      %s16 = sshll.u32 %s0, 4
      %s17 = int_to_ptr.hbm [resolvable:$true] %s16
      %s18 = sshll.u32 [#allocation2], 4
      %s19 = int_to_ptr.vmem [resolvable:$true] %s18
      %21 = dma.hbm_to_vmem [thread:$0]  %s17, 256, %s19, [#allocation3]
    $region5: #{tpu_custom_call.1} parent=1 // pred_fallthru
      _
    // Predicated region
    $region6: #{tpu_custom_call.1} parent=1 // pred_check
      _
    $region7: #{tpu_custom_call.1} parent=1 // pred_check_branch
      %23 = sbr.rel (0) target = $region9
    $region8: #{tpu_custom_call.1} parent=1 // pred_region
      %25 = vsyncadd [#allocation6], 0
      %s26 = sshll.u32 %s1, 4
      %s27 = int_to_ptr.hbm [resolvable:$true] %s26
      %s28 = sshll.u32 [#allocation5], 4
      %s29 = int_to_ptr.vmem [resolvable:$true] %s28
      %34 = dma.hbm_to_vmem [thread:$0]  %s27, 2816, %s29, [#allocation6], 128, 128, 8
    $region9: #{tpu_custom_call.1} parent=1 // pred_fallthru
      _
    // Predicated region
    $region10: #{tpu_custom_call.1} parent=1 // pred_check
      _
    $region11: #{tpu_custom_call.1} parent=1 // pred_check_branch
      %36 = sbr.rel (0) target = $region13
    $region12: #{tpu_custom_call.1} parent=1 // pred_region
      _
    $region13: #{tpu_custom_call.1} parent=1 // pred_fallthru
      _
    // Predicated region
    $region14: #{tpu_custom_call.1} parent=1 // pred_check
      _
    $region15: #{tpu_custom_call.1} parent=1 // pred_check_branch
      %38 = sbr.rel (0) target = $region17
    $region16: #{tpu_custom_call.1} parent=1 // pred_region
      %40 = dma.done [#allocation3], 256
    $region17: #{tpu_custom_call.1} parent=1 // pred_fallthru
      _
    // Predicated region
    $region18: #{tpu_custom_call.1} parent=1 // pred_check
      _
    $region19: #{tpu_custom_call.1} parent=1 // pred_check_branch
      %42 = sbr.rel (0) target = $region21
    $region20: #{tpu_custom_call.1} parent=1 // pred_region
      %44 = dma.done [#allocation6], 2816
    $region21: #{tpu_custom_call.1} parent=1 // pred_fallthru
      _
    %v45 = vld [vmem:[#allocation2] sm:$0xff]
    %v46 = vld [vmem:[#allocation2 + $0x8] sm:$0xff]
    %v47 = vld [vmem:[#allocation5] sm:$0xff]
    %v48 = vld [vmem:[#allocation5 + $0x8] sm:$0xff]
    %v49 = vld [vmem:[#allocation5 + $0x10] sm:$0xff]
    %v50 = vld [vmem:[#allocation5 + $0x18] sm:$0xff]
    %v51 = vld [vmem:[#allocation5 + $0x20] sm:$0xff]
    %v52 = vld [vmem:[#allocation5 + $0x28] sm:$0xff]
    %v53 = vld [vmem:[#allocation5 + $0x30] sm:$0xff]
    %v54 = vld [vmem:[#allocation5 + $0x38] sm:$0xff]
    %v55 = vld [vmem:[#allocation5 + $0x40] sm:$0xff]
    %v56 = vld [vmem:[#allocation5 + $0x48] sm:$0xff]
    %v57 = vld [vmem:[#allocation5 + $0x50] sm:$0xff]
    %v58 = vld [vmem:[#allocation5 + $0x58] sm:$0xff]
    %v59 = vld [vmem:[#allocation5 + $0x60] sm:$0xff]
    %v60 = vld [vmem:[#allocation5 + $0x68] sm:$0xff]
    %v61 = vld [vmem:[#allocation5 + $0x70] sm:$0xff]
    %v62 = vld [vmem:[#allocation5 + $0x78] sm:$0xff]
    %v63 = vld [vmem:[#allocation5 + $0x80] sm:$0xff]
    %v64 = vld [vmem:[#allocation5 + $0x88] sm:$0xff]
    %v65 = vld [vmem:[#allocation5 + $0x90] sm:$0xff]
    %v66 = vld [vmem:[#allocation5 + $0x98] sm:$0xff]
    %v67 = vld [vmem:[#allocation5 + $0xa0] sm:$0xff]
    %v68 = vld [vmem:[#allocation5 + $0xa8] sm:$0xff]
    %v69 = vld [vmem:[%s2] sm:$0x1]
    %v71 = vperm.slane %v69, 0
    %vm73 = vcmask 392192
    %v75 = vsel %vm73, %v46, 0
    %77 = vmatpush.msra.mxu0 %v62
    %78 = vmatpush.msra.mxu0 %v61
    %79 = vmatpush.msra.mxu0 %v60
    %80 = vmatpush.msra.mxu0 %v59
    %81 = vmatpush.msra.mxu0 %v58
    %82 = vmatpush.msra.mxu0 %v57
    %83 = vmatpush.msra.mxu0 %v56
    %84 = vmatpush.msra.mxu0 %v55
    %85 = vmatpush.msra.mxu0 %v54
    %86 = vmatpush.msra.mxu0 %v53
    %87 = vmatpush.msra.mxu0 %v52
    %88 = vmatpush.msra.mxu0 %v51
    %89 = vmatpush.msra.mxu0 %v50
    %90 = vmatpush.msra.mxu0 %v49
    %91 = vmatpush.msra.mxu0 %v48
    %92 = vmatpush.msra.mxu0 %v47
    %93 = vmatmul.f32.gmra.mxu0 %v45
    %v94 = vpop.f32.mrf.mxu0
    %v95 = vadd.f32 %v71, %v94
    %96 = vdwg.mxu0
    %97 = vmatpush.msra.mxu0 0.0
    %98 = vmatpush.msra.mxu0 0.0
    %99 = vmatpush.msra.mxu0 0.0
    %100 = vmatpush.msra.mxu0 0.0
    %101 = vmatpush.msra.mxu0 0.0
    %102 = vmatpush.msra.mxu0 0.0
    %103 = vmatpush.msra.mxu0 0.0
    %104 = vmatpush.msra.mxu0 0.0
    %105 = vmatpush.msra.mxu0 0.0
    %106 = vmatpush.msra.mxu0 0.0
    %107 = vmatpush.msra.mxu0 %v68
    %108 = vmatpush.msra.mxu0 %v67
    %109 = vmatpush.msra.mxu0 %v66
    %110 = vmatpush.msra.mxu0 %v65
    %111 = vmatpush.msra.mxu0 %v64
    %112 = vmatpush.msra.mxu0 %v63
    %113 = vmatmul.f32.gmra.mxu0 %v75
    %v114 = vpop.f32.mrf.mxu0
    %v115 = vadd.f32 %v95, %v114
    %116 = vdwg.mxu0
    %vm117 = vcmp.ge.f32.partialorder %v115, 0.0
    %v118 = vmul.f32 %v115, 0.02
    %v119 = vsel %vm117, %v115, %v118
    %120 = vmax.xlane.f32.xlu0 %v119
    %v121 = vpop.xlane.xlu0 %120
    %v122 = vsub.f32 %v119, %v121
    %v123 = vmul.f32 %v122, 1.442695
    %v124 = vpow.pop %v123
    %125 = vadd.xlane.f32.xlu0 %v124
    %v126 = vpop.xlane.xlu0 %125
    %v127 = vrcp.pop %v126
    %v128 = vmul.f32 %v126, %v127
    %v129 = vsub.f32 2.0, %v128
    %v130 = vmul.f32 %v127, %v129
    %v131 = vmul.f32 %v124, %v130
    %132 = vst [vmem:[#allocation7] sm:$0xff] %v131
    // Predicated region
    $region22: #{tpu_custom_call.1} parent=1 // pred_check
      _
    $region23: #{tpu_custom_call.1} parent=1 // pred_check_branch
      %134 = sbr.rel (0) target = $region25
    $region24: #{tpu_custom_call.1} parent=1 // pred_region
      %136 = vsyncadd [#allocation4], 0
      %s138 = sshll.u32 [#allocation7], 4
      %s139 = int_to_ptr.vmem [resolvable:$true] %s138
      %s140 = sshll.u32 %s3, 4
      %s141 = int_to_ptr.hbm [resolvable:$true] %s140
      %143 = dma.vmem_to_hbm [thread:$0]  %s139, 128, %s141, [#allocation4]
    $region25: #{tpu_custom_call.1} parent=1 // pred_fallthru
      _
    // Predicated region
    $region26: #{tpu_custom_call.1} parent=1 // pred_check
      _
    $region27: #{tpu_custom_call.1} parent=1 // pred_check_branch
      %145 = sbr.rel (0) target = $region29
    $region28: #{tpu_custom_call.1} parent=1 // pred_region
      %147 = dma.done [#allocation4], 128
    $region29: #{tpu_custom_call.1} parent=1 // pred_fallthru
      _
    %148 = vsyncpa [#allocation3], 1
    %149 = vsyncpa [#allocation6], 1
    %150 = vsyncpa [#allocation4], 1

</llo_original>
